<compile_context>
chip_gen: v7x
topology: tpu7x:2x2x1
jax: 0.10.0
libtpu: 0.0.40
codegen_flags: <defaults>
</compile_context>

<pallas_src>
from functools import partial

import jax
import jax.numpy as jnp
from jax.experimental import pallas as pl
from jax.experimental.pallas import tpu as pltpu


def _sa3d_kernel(x_ref, wqkv_ref, wp_ref, bp_ref, mask_ref, o_ref, *, scale):
    """One batch element per grid step (channels-first).

    x_ref    : (1, C, Np)  activations, Np = D*H*W zero-padded to mult. of 128
    wqkv_ref : (3C, C)     fused qkv conv weight
    wp_ref   : (C, C)      proj conv weight
    bp_ref   : (C, 1)      proj bias (f32, broadcasts over lanes)
    mask_ref : (C, C)      additive cross-head mask (0 in-head / -1e30 off-head)
    o_ref    : (1, C, Np)  output
    """
    x = x_ref[0]                                                      # (C, Np)
    C = x.shape[0]
    dt = x.dtype                                                      # matmul operand dtype

    # Fused 1x1x1 qkv conv: one MXU matmul -> (3C, Np) with f32 accumulation.
    qkv = jnp.dot(wqkv_ref[...], x, preferred_element_type=jnp.float32)
    q = qkv[0 * C:1 * C].astype(dt)                                   # (C, Np)
    k = qkv[1 * C:2 * C].astype(dt)
    v = qkv[2 * C:3 * C].astype(dt)

    # Block-diagonal channel attention: S[i, j] = scale * sum_n q[i,n] k[j,n].
    # (hd = C//heads is small here; for hd >= 128 a per-head batched matmul
    #  would avoid the heads-x redundant score FLOPs -- not needed here.)
    s = jax.lax.dot_general(q, k, (((1,), (1,)), ((), ())),
                            preferred_element_type=jnp.float32)       # (C, C)
    s = s * scale + mask_ref[...]                                     # f32

    # Numerically stable softmax over the last axis, kept entirely in f32
    # (cross-head entries underflow to exactly 0). Exact division.
    s = s - jnp.max(s, axis=-1, keepdims=True)
    p = jnp.exp(s)
    p = p / jnp.sum(p, axis=-1, keepdims=True)

    # out[i, n] = sum_j p[i, j] v[j, n]   -> (C, Np), f32 accumulation.
    out = jnp.dot(p.astype(dt), v, preferred_element_type=jnp.float32)

    # Final 1x1x1 conv projection (with f32 bias).
    proj = jnp.dot(wp_ref[...], out.astype(dt),
                   preferred_element_type=jnp.float32)
    proj = proj + bp_ref[...]                                         # (C,1) bcast
    o_ref[0] = proj.astype(o_ref.dtype)


def self_attention_3d(x, w_qkv, w_proj, b_proj, *, heads, dim_head=64):
    """x: (B, C, D, H, W); w_qkv: (3C, C); w_proj: (C, C); b_proj: (C,).

    Matmuls run in the dtype of x / the weights (pass bf16 operands for native
    bf16 MXU rate and halved HBM traffic); accumulation and softmax stay in
    f32. Output dtype == x.dtype.
    """
    B, C, D, H, W = x.shape
    assert C % heads == 0, f"heads={heads} must divide channels={C}"
    assert w_qkv.shape == (3 * C, C) and w_proj.shape == (C, C)
    N = D * H * W
    Np = ((N + 127) // 128) * 128          # lane-dense (multiple of 128)
    scale = float(dim_head) ** -0.5

    # Channels-first spatial flatten (same reshape PyTorch does); zero-pad the
    # lane axis -- exact: padded columns contribute nothing to the attention.
    x_bcn = x.reshape(B, C, N)
    if Np != N:
        x_bcn = jnp.pad(x_bcn, ((0, 0), (0, 0), (0, Np - N)))

    # Constant cross-head additive mask + f32 bias, built once in the wrapper.
    hd = C // heads
    head_id = jnp.arange(C, dtype=jnp.int32) // hd
    mask = jnp.where(head_id[:, None] == head_id[None, :], 0.0, -1e30)
    mask = mask.astype(jnp.float32)
    bp = b_proj.astype(jnp.float32).reshape(C, 1)

    # VMEM budget: double-buffered activation blocks + weights + f32 temps,
    # capped at 48 MiB (v7x TensorCore has only 64 MiB physical VMEM).
    act_bytes = C * Np * x_bcn.dtype.itemsize
    wgt_bytes = 4 * C * C * w_qkv.dtype.itemsize + (C * C + C) * 4
    tmp_bytes = (4 * C * Np + 2 * C * C) * 4
    need = 2 * (2 * act_bytes) + 2 * wgt_bytes + tmp_bytes
    vmem_limit = int(min(max(2 * need, 16 * 1024 * 1024), 48 * 1024 * 1024))

    kernel = partial(_sa3d_kernel, scale=scale)

    out_bcn = pl.pallas_call(
        kernel,
        out_shape=jax.ShapeDtypeStruct((B, C, Np), x.dtype),
        grid_spec=pltpu.PrefetchScalarGridSpec(
            num_scalar_prefetch=0,
            grid=(B,),
            in_specs=[
                pl.BlockSpec((1, C, Np), lambda b: (b, 0, 0)),   # x
                pl.BlockSpec((3 * C, C), lambda b: (0, 0)),      # fused qkv W
                pl.BlockSpec((C, C), lambda b: (0, 0)),          # proj W
                pl.BlockSpec((C, 1), lambda b: (0, 0)),          # proj bias
                pl.BlockSpec((C, C), lambda b: (0, 0)),          # cross-head mask
            ],
            out_specs=pl.BlockSpec((1, C, Np), lambda b: (b, 0, 0)),
        ),
        compiler_params=pltpu.CompilerParams(
            dimension_semantics=("parallel",),   # batch -> megacore / 2 TCs
            vmem_limit_bytes=vmem_limit,
        ),
    )(x_bcn, w_qkv, w_proj, bp, mask)

    # Drop lane padding, back to NCDHW (pure reshape, no relayout).
    return out_bcn[:, :, :N].reshape(B, C, D, H, W)


def reference_self_attention_3d(x, w_qkv, w_proj, b_proj, *, heads, dim_head=64):
    """Pure-JAX mirror of the PyTorch forward (channels-first), for checking."""
    B, C, D, H, W = x.shape
    N = D * H * W
    scale = float(dim_head) ** -0.5
    xf = x.reshape(B, C, N)
    qkv = jnp.einsum('oc,bcn->bon', w_qkv, xf)          # 1x1x1 conv, no bias
    q, k, v = jnp.split(qkv, 3, axis=1)
    hd = C // heads
    q = q.reshape(B, heads, hd, N)
    k = k.reshape(B, heads, hd, N)
    v = v.reshape(B, heads, hd, N)
    attn = jnp.einsum('bhid,bhjd->bhij', q, k) * scale
    attn = jax.nn.softmax(attn, axis=-1)
    out = jnp.einsum('bhij,bhjd->bhid', attn, v).reshape(B, C, N)
    proj = jnp.einsum('oc,bcn->bon', w_proj, out) + b_proj[None, :, None]
    return proj.reshape(B, C, D, H, W)


if __name__ == "__main__":
    # Small shapes consistent with the module: dim=32, heads=4, spatial 4x4x4.
    B, C, D, H, W = 2, 32, 4, 4, 4
    HEADS = 4
    DIM_HEAD = 64  # constructor default; only affects the softmax scale

    key = jax.random.PRNGKey(0)
    k_x, k_qkv, k_proj, k_bias = jax.random.split(key, 4)

    x = jax.random.normal(k_x, (B, C, D, H, W), jnp.float32)
    # Deterministic synthetic parameters (Conv3d k=1 weights, squeezed).
    w_qkv = jax.random.normal(k_qkv, (3 * C, C), jnp.float32) * (C ** -0.5)
    w_proj = jax.random.normal(k_proj, (C, C), jnp.float32) * (C ** -0.5)
    b_proj = jax.random.normal(k_bias, (C,), jnp.float32) * 0.01

    ref = reference_self_attention_3d(x, w_qkv, w_proj, b_proj, heads=HEADS,
                                      dim_head=DIM_HEAD)

    # f32 run: must match the PyTorch-equivalent reference tightly.
    out = self_attention_3d(x, w_qkv, w_proj, b_proj, heads=HEADS,
                            dim_head=DIM_HEAD)
    jax.block_until_ready(out)
    err = float(jnp.max(jnp.abs(out - ref)))
    assert err < 1e-3, f"f32 max abs error {err}"

    # bf16-operand run (f32 accumulation + f32 softmax in-kernel). Tolerance
    # reflects bf16 operand rounding (~0.4% rel) at output magnitudes ~O(1);
    # expected max-abs error is ~5e-2.
    out_bf16 = self_attention_3d(
        x.astype(jnp.bfloat16), w_qkv.astype(jnp.bfloat16),
        w_proj.astype(jnp.bfloat16), b_proj, heads=HEADS, dim_head=DIM_HEAD)
    jax.block_until_ready(out_bf16)
    err_bf16 = float(jnp.max(jnp.abs(out_bf16.astype(jnp.float32) - ref)))
    assert err_bf16 < 2e-1, f"bf16 max abs error {err_bf16}"

    print("KERNEL_OK")
</pallas_src>

<mosaic_0001>
module attributes {stable_mosaic.version = 11 : i64} {
  func.func @_sa3d_kernel(%arg0: i32, %arg1: memref<1x32x128xf32, #tpu.memory_space<vmem>>, %arg2: memref<96x32xf32, #tpu.memory_space<vmem>>, %arg3: memref<32x32xf32, #tpu.memory_space<vmem>>, %arg4: memref<32x1xf32, #tpu.memory_space<vmem>>, %arg5: memref<32x32xf32, #tpu.memory_space<vmem>>, %arg6: memref<1x32x128xf32, #tpu.memory_space<vmem>>) attributes {dimension_semantics = [#tpu.dimension_semantics<parallel>], iteration_bounds = array<i64: 2>, scalar_prefetch = 0 : i64, scratch_operands = 0 : i64, tpu.core_type = #tpu.core_type<tc>, window_params = [{transform_indices = @transform_0, window_bounds = array<i64: 1, 32, 128>}, {pipeline_mode = #tpu.pipeline_mode<synchronous>, transform_indices = @transform_1, window_bounds = array<i64: 96, 32>}, {pipeline_mode = #tpu.pipeline_mode<synchronous>, transform_indices = @transform_2, window_bounds = array<i64: 32, 32>}, {pipeline_mode = #tpu.pipeline_mode<synchronous>, transform_indices = @transform_3, window_bounds = array<i64: 32, 1>}, {pipeline_mode = #tpu.pipeline_mode<synchronous>, transform_indices = @transform_4, window_bounds = array<i64: 32, 32>}, {transform_indices = @transform_5, window_bounds = array<i64: 1, 32, 128>}]} {
    %c0 = arith.constant 0 : index
    %c0_0 = arith.constant 0 : index
    %c0_1 = arith.constant 0 : index
    %0 = vector.load %arg1[%c0, %c0_0, %c0_1] : memref<1x32x128xf32, #tpu.memory_space<vmem>>, vector<1x32x128xf32>
    %1 = vector.shape_cast %0 : vector<1x32x128xf32> to vector<32x128xf32>
    %c0_2 = arith.constant 0 : index
    %c0_3 = arith.constant 0 : index
    %2 = vector.load %arg2[%c0_2, %c0_3] : memref<96x32xf32, #tpu.memory_space<vmem>>, vector<96x32xf32>
    %cst = arith.constant dense<0.000000e+00> : vector<96x128xf32>
    %3 = tpu.matmul %2, %1, %cst {dimension_numbers = #tpu.dot_dimension_numbers<[1], [0], [0], [1], [0, 0, 1, 1], [], []>} : vector<96x32xf32>, vector<32x128xf32>, vector<96x128xf32> -> vector<96x128xf32>
    %4 = vector.extract_strided_slice %3 {offsets = [0, 0], sizes = [32, 128], strides = [1, 1]} : vector<96x128xf32> to vector<32x128xf32>
    %5 = vector.extract_strided_slice %3 {offsets = [32, 0], sizes = [32, 128], strides = [1, 1]} : vector<96x128xf32> to vector<32x128xf32>
    %6 = vector.extract_strided_slice %3 {offsets = [64, 0], sizes = [32, 128], strides = [1, 1]} : vector<96x128xf32> to vector<32x128xf32>
    %cst_4 = arith.constant dense<0.000000e+00> : vector<32x32xf32>
    %7 = tpu.matmul %4, %5, %cst_4 {dimension_numbers = #tpu.dot_dimension_numbers<[1], [1], [0], [0], [0, 0, 1, 0], [], []>} : vector<32x128xf32>, vector<32x128xf32>, vector<32x32xf32> -> vector<32x32xf32>
    %cst_5 = arith.constant 1.250000e-01 : f32
    %8 = vector.broadcast %cst_5 : f32 to vector<32x32xf32>
    %9 = arith.mulf %7, %8 : vector<32x32xf32>
    %c0_6 = arith.constant 0 : index
    %c0_7 = arith.constant 0 : index
    %10 = vector.load %arg5[%c0_6, %c0_7] : memref<32x32xf32, #tpu.memory_space<vmem>>, vector<32x32xf32>
    %11 = arith.addf %9, %10 : vector<32x32xf32>
    %cst_8 = arith.constant dense<0xFF800000> : vector<32xf32>
    %12 = vector.multi_reduction <maximumf>, %11, %cst_8 [1] : vector<32x32xf32> to vector<32xf32>
    %13 = vector.shape_cast %12 : vector<32xf32> to vector<32x1xf32>
    %14 = vector.broadcast %13 : vector<32x1xf32> to vector<32x32xf32>
    %15 = arith.subf %11, %14 : vector<32x32xf32>
    %16 = math.exp %15 : vector<32x32xf32>
    %cst_9 = arith.constant dense<0.000000e+00> : vector<32xf32>
    %17 = vector.multi_reduction <add>, %16, %cst_9 [1] : vector<32x32xf32> to vector<32xf32>
    %18 = vector.shape_cast %17 : vector<32xf32> to vector<32x1xf32>
    %19 = vector.broadcast %18 : vector<32x1xf32> to vector<32x32xf32>
    %20 = arith.divf %16, %19 : vector<32x32xf32>
    %cst_10 = arith.constant dense<0.000000e+00> : vector<32x128xf32>
    %21 = tpu.matmul %20, %6, %cst_10 {dimension_numbers = #tpu.dot_dimension_numbers<[1], [0], [0], [1], [0, 0, 1, 1], [], []>} : vector<32x32xf32>, vector<32x128xf32>, vector<32x128xf32> -> vector<32x128xf32>
    %c0_11 = arith.constant 0 : index
    %c0_12 = arith.constant 0 : index
    %22 = vector.load %arg3[%c0_11, %c0_12] : memref<32x32xf32, #tpu.memory_space<vmem>>, vector<32x32xf32>
    %cst_13 = arith.constant dense<0.000000e+00> : vector<32x128xf32>
    %23 = tpu.matmul %22, %21, %cst_13 {dimension_numbers = #tpu.dot_dimension_numbers<[1], [0], [0], [1], [0, 0, 1, 1], [], []>} : vector<32x32xf32>, vector<32x128xf32>, vector<32x128xf32> -> vector<32x128xf32>
    %c0_14 = arith.constant 0 : index
    %c0_15 = arith.constant 0 : index
    %24 = vector.load %arg4[%c0_14, %c0_15] : memref<32x1xf32, #tpu.memory_space<vmem>>, vector<32x1xf32>
    %25 = vector.broadcast %24 : vector<32x1xf32> to vector<32x128xf32>
    %26 = arith.addf %23, %25 : vector<32x128xf32>
    %c0_16 = arith.constant 0 : index
    %c0_17 = arith.constant 0 : index
    %c0_18 = arith.constant 0 : index
    %27 = vector.load %arg6[%c0_16, %c0_17, %c0_18] : memref<1x32x128xf32, #tpu.memory_space<vmem>>, vector<1x32x128xf32>
    %28 = vector.shape_cast %27 : vector<1x32x128xf32> to vector<32x128xf32>
    %29 = vector.shape_cast %26 : vector<32x128xf32> to vector<1x32x128xf32>
    tpu.vector_store %arg6[%c0_16, %c0_17, %c0_18], %29 {strides = array<i32>} : memref<1x32x128xf32, #tpu.memory_space<vmem>>, vector<1x32x128xf32>,
    return
  }
  func.func @transform_0(%arg0: i32) -> (i32, i32, i32) {
    %c0_i32 = arith.constant 0 : i32
    %c0_i32_0 = arith.constant 0 : i32
    %c0_i32_1 = arith.constant 0 : i32
    return %arg0, %c0_i32, %c0_i32_0 : i32, i32, i32
  }
  func.func @transform_1(%arg0: i32) -> (i32, i32) {
    %c0_i32 = arith.constant 0 : i32
    %c0_i32_0 = arith.constant 0 : i32
    %c0_i32_1 = arith.constant 0 : i32
    return %c0_i32, %c0_i32_0 : i32, i32
  }
  func.func @transform_2(%arg0: i32) -> (i32, i32) {
    %c0_i32 = arith.constant 0 : i32
    %c0_i32_0 = arith.constant 0 : i32
    %c0_i32_1 = arith.constant 0 : i32
    return %c0_i32, %c0_i32_0 : i32, i32
  }
  func.func @transform_3(%arg0: i32) -> (i32, i32) {
    %c0_i32 = arith.constant 0 : i32
    %c0_i32_0 = arith.constant 0 : i32
    %c0_i32_1 = arith.constant 0 : i32
    return %c0_i32, %c0_i32_0 : i32, i32
  }
  func.func @transform_4(%arg0: i32) -> (i32, i32) {
    %c0_i32 = arith.constant 0 : i32
    %c0_i32_0 = arith.constant 0 : i32
    %c0_i32_1 = arith.constant 0 : i32
    return %c0_i32, %c0_i32_0 : i32, i32
  }
  func.func @transform_5(%arg0: i32) -> (i32, i32, i32) {
    %c0_i32 = arith.constant 0 : i32
    %c0_i32_0 = arith.constant 0 : i32
    %c0_i32_1 = arith.constant 0 : i32
    return %arg0, %c0_i32, %c0_i32_0 : i32, i32, i32
  }
}

</mosaic_0001>

<llo_original>
// kernel: tpu_custom_call.1
$region0: #{tpu_custom_call.1}
  #allocation0 [shape = 'u32[]', space=smem, size = 0x4, offset = 0x4, fixed_abs, tag = 'smem constant byte address 0x4 - core index']
  #allocation1 [shape = 'u32[144,128]{1,0:T(1,128)}', space=vmem, size = 0x12000, scoped, tag = 'internal scratch']
  %s0 = inlined_call_operand.vmem [shape: f32[2,32,128], index: 0, kind: input, shape index: {}]
  %s1 = inlined_call_operand.vmem [shape: f32[96,32], index: 1, kind: input, shape index: {}]
  %s2 = inlined_call_operand.vmem [shape: f32[32,32], index: 2, kind: input, shape index: {}]
  %s3 = inlined_call_operand.vmem [shape: f32[32,1], index: 3, kind: input, shape index: {}]
  %s4 = inlined_call_operand.vmem [shape: f32[32,32], index: 4, kind: input, shape index: {}]
  %s5 = inlined_call_operand.hbm [shape: f32[2,32,128], index: 5, kind: output, shape index: {}]
  %s6 = sld [smem:[#allocation0]]
  $region53: #{tpu_custom_call.1} parent=0
    _
  %s8 = ssub.s32 1, %s6
  %s9 = scalar_select 0, %s8, %s6
  $region1: #{tpu_custom_call.1} parent=0
    #allocation2 [shape = 'u8[32768]{0}', space=vmem, size = 0x8000, scoped, tag = 'output window, operand 0']
    #allocation3 [shape = 's32[2]{0}', space=sflag, size = 0x8, scoped, tag = 'scoped memory for tpu_custom_call.1']
    %10 = vsyncpa [#allocation3], 0
    %s11 = scalar_lea.sflag [#allocation3], 1
    %12 = vsyncpa %s11, 0
    loop: start=0, step=1, limit=4
    $region2: #{tpu_custom_call.1} parent=1 // loop_pre_header
      _
    $region3: #{tpu_custom_call.1} parent=1 // loop_header
      %s14 = sphi 0, %s18
      %p15 = scmp.ge.s32.totalorder %s14, 4
      %s24 = sphi 0, %s26
      %s27 = sphi 0, %s24
      %s28 = sphi 0, %s27
      %s44 = sphi 0, %s28
      %s48 = sphi 0, %s48
      %s50 = sphi 0, %s48
      %s51 = sphi 0, %s50
      %s65 = sphi 0, %s51
      %s69 = sphi 0, %s69
      %s71 = sphi 0, %s69
      %s72 = sphi 0, %s71
      %s86 = sphi 0, %s72
      %s90 = sphi 0, %s90
      %s92 = sphi 0, %s90
      %s93 = sphi 0, %s92
      %s107 = sphi 0, %s93
      %s111 = sphi 0, %s111
      %s113 = sphi 0, %s111
      %s114 = sphi 0, %s113
      %s128 = sphi 0, %s114
      %s134 = sphi 0, %s136
      %s137 = sphi 0, %s134
      %s138 = sphi 0, %s137
      %s154 = sphi 0, %s138
    $region4: #{tpu_custom_call.1} parent=1 // loop_header_branch
      %17 = sbr.rel (%p15) target = $region8
    $region5: #{tpu_custom_call.1} parent=1 // loop_body
      %s19 = ssub.s32 %s14, 1
      %s20 = ssub.s32 %s14, 2
      %s21 = sadd.s32 %s14, 1
      %s22 = ssub.s32 %s14, %s21
      %p23 = scmp.eq.s32.totalorder %s22, 0
      %s25 = sadd.s32 %s24, 1
      %s26 = scalar_select %p23, %s24, %s25
      %p29 = pneg %p23
      %p30 = scmp.eq.s32.totalorder %s14, 1
      %p31 = por %p29, %p30
      %p32 = scmp.ne.s32.totalorder %s24, %s27
      %p33 = scmp.eq.s32.totalorder %s14, 0
      %p34 = por %p32, %p33
      %p35 = scmp.ne.s32.totalorder %s24, %s27
      %p36 = scmp.eq.s32.totalorder %s19, 1
      %p37 = por %p35, %p36
      %p38 = scmp.ne.s32.totalorder %s27, %s28
      %p39 = scmp.eq.s32.totalorder %s19, 0
      %p40 = por %p38, %p39
      %p41 = scmp.ne.s32.totalorder %s27, %s28
      %p42 = scmp.eq.s32.totalorder %s20, 1
      %p43 = por %p41, %p42
      %p45 = scmp.ne.s32.totalorder %s28, %s44
      %p46 = scmp.eq.s32.totalorder %s20, 0
      %p47 = por %p45, %p46
      %s49 = sadd.s32 %s48, 1
      %p52 = scmp.eq.s32.totalorder %s14, 1
      %p53 = scmp.ne.s32.totalorder %s48, %s50
      %p54 = scmp.eq.s32.totalorder %s14, 0
      %p55 = por %p53, %p54
      %p56 = scmp.ne.s32.totalorder %s48, %s50
      %p57 = scmp.eq.s32.totalorder %s19, 1
      %p58 = por %p56, %p57
      %p59 = scmp.ne.s32.totalorder %s50, %s51
      %p60 = scmp.eq.s32.totalorder %s19, 0
      %p61 = por %p59, %p60
      %p62 = scmp.ne.s32.totalorder %s50, %s51
      %p63 = scmp.eq.s32.totalorder %s20, 1
      %p64 = por %p62, %p63
      %p66 = scmp.ne.s32.totalorder %s51, %s65
      %p67 = scmp.eq.s32.totalorder %s20, 0
      %p68 = por %p66, %p67
      %s70 = sadd.s32 %s69, 1
      %p73 = scmp.eq.s32.totalorder %s14, 1
      %p74 = scmp.ne.s32.totalorder %s69, %s71
      %p75 = scmp.eq.s32.totalorder %s14, 0
      %p76 = por %p74, %p75
      %p77 = scmp.ne.s32.totalorder %s69, %s71
      %p78 = scmp.eq.s32.totalorder %s19, 1
      %p79 = por %p77, %p78
      %p80 = scmp.ne.s32.totalorder %s71, %s72
      %p81 = scmp.eq.s32.totalorder %s19, 0
      %p82 = por %p80, %p81
      %p83 = scmp.ne.s32.totalorder %s71, %s72
      %p84 = scmp.eq.s32.totalorder %s20, 1
      %p85 = por %p83, %p84
      %p87 = scmp.ne.s32.totalorder %s72, %s86
      %p88 = scmp.eq.s32.totalorder %s20, 0
      %p89 = por %p87, %p88
      %s91 = sadd.s32 %s90, 1
      %p94 = scmp.eq.s32.totalorder %s14, 1
      %p95 = scmp.ne.s32.totalorder %s90, %s92
      %p96 = scmp.eq.s32.totalorder %s14, 0
      %p97 = por %p95, %p96
      %p98 = scmp.ne.s32.totalorder %s90, %s92
      %p99 = scmp.eq.s32.totalorder %s19, 1
      %p100 = por %p98, %p99
      %p101 = scmp.ne.s32.totalorder %s92, %s93
      %p102 = scmp.eq.s32.totalorder %s19, 0
      %p103 = por %p101, %p102
      %p104 = scmp.ne.s32.totalorder %s92, %s93
      %p105 = scmp.eq.s32.totalorder %s20, 1
      %p106 = por %p104, %p105
      %p108 = scmp.ne.s32.totalorder %s93, %s107
      %p109 = scmp.eq.s32.totalorder %s20, 0
      %p110 = por %p108, %p109
      %s112 = sadd.s32 %s111, 1
      %p115 = scmp.eq.s32.totalorder %s14, 1
      %p116 = scmp.ne.s32.totalorder %s111, %s113
      %p117 = scmp.eq.s32.totalorder %s14, 0
      %p118 = por %p116, %p117
      %p119 = scmp.ne.s32.totalorder %s111, %s113
      %p120 = scmp.eq.s32.totalorder %s19, 1
      %p121 = por %p119, %p120
      %p122 = scmp.ne.s32.totalorder %s113, %s114
      %p123 = scmp.eq.s32.totalorder %s19, 0
      %p124 = por %p122, %p123
      %p125 = scmp.ne.s32.totalorder %s113, %s114
      %p126 = scmp.eq.s32.totalorder %s20, 1
      %p127 = por %p125, %p126
      %p129 = scmp.ne.s32.totalorder %s114, %s128
      %p130 = scmp.eq.s32.totalorder %s20, 0
      %p131 = por %p129, %p130
      %s132 = ssub.s32 %s14, %s21
      %p133 = scmp.eq.s32.totalorder %s132, 0
      %s135 = sadd.s32 %s134, 1
      %s136 = scalar_select %p133, %s134, %s135
      %p139 = pneg %p133
      %p140 = scmp.eq.s32.totalorder %s14, 1
      %p141 = por %p139, %p140
      %p142 = scmp.ne.s32.totalorder %s134, %s137
      %p143 = scmp.eq.s32.totalorder %s14, 0
      %p144 = por %p142, %p143
      %p145 = scmp.ne.s32.totalorder %s134, %s137
      %p146 = scmp.eq.s32.totalorder %s19, 1
      %p147 = por %p145, %p146
      %p148 = scmp.ne.s32.totalorder %s137, %s138
      %p149 = scmp.eq.s32.totalorder %s19, 0
      %p150 = por %p148, %p149
      %p151 = scmp.ne.s32.totalorder %s137, %s138
      %p152 = scmp.eq.s32.totalorder %s20, 1
      %p153 = por %p151, %p152
      %p155 = scmp.ne.s32.totalorder %s138, %s154
      %p156 = scmp.eq.s32.totalorder %s20, 0
      %p157 = por %p155, %p156
      %p158 = scmp.le.s32.totalorder 1, %s14
      %p159 = scmp.lt.s32.totalorder %s14, 3
      %p160 = pnand %p158, %p159
      %p161 = pneg %p160
      // Predicated region
      $region9: #{tpu_custom_call.1} parent=5 // pred_check
        _
      $region10: #{tpu_custom_call.1} parent=5 // pred_check_branch
        %163 = sbr.rel (%p160) target = $region12
      $region11: #{tpu_custom_call.1} parent=5 // pred_region
        %s164 = ssub.s32 %s14, 1
        // Predicated region
        $region13: #{tpu_custom_call.1} parent=11 // pred_check
          %p165 = pneg %p61
        $region14: #{tpu_custom_call.1} parent=11 // pred_check_branch
          %167 = sbr.rel (%p165) target = $region16
        $region15: #{tpu_custom_call.1} parent=11 // pred_region
          _
        $region16: #{tpu_custom_call.1} parent=11 // pred_fallthru
          _
        // Predicated region
        $region17: #{tpu_custom_call.1} parent=11 // pred_check
          %p168 = pneg %p82
        $region18: #{tpu_custom_call.1} parent=11 // pred_check_branch
          %170 = sbr.rel (%p168) target = $region20
        $region19: #{tpu_custom_call.1} parent=11 // pred_region
          _
        $region20: #{tpu_custom_call.1} parent=11 // pred_fallthru
          _
        // Predicated region
        $region21: #{tpu_custom_call.1} parent=11 // pred_check
          %p171 = pneg %p103
        $region22: #{tpu_custom_call.1} parent=11 // pred_check_branch
          %173 = sbr.rel (%p171) target = $region24
        $region23: #{tpu_custom_call.1} parent=11 // pred_region
          _
        $region24: #{tpu_custom_call.1} parent=11 // pred_fallthru
          _
        // Predicated region
        $region25: #{tpu_custom_call.1} parent=11 // pred_check
          %p174 = pneg %p124
        $region26: #{tpu_custom_call.1} parent=11 // pred_check_branch
          %176 = sbr.rel (%p174) target = $region28
        $region27: #{tpu_custom_call.1} parent=11 // pred_region
          _
        $region28: #{tpu_custom_call.1} parent=11 // pred_fallthru
          _
      $region12: #{tpu_custom_call.1} parent=5 // pred_fallthru
        _
      %p177 = scmp.lt.s32.totalorder %s14, 2
      // Predicated region
      $region29: #{tpu_custom_call.1} parent=5 // pred_check
        %p178 = pneg %p177
      $region30: #{tpu_custom_call.1} parent=5 // pred_check_branch
        %180 = sbr.rel (%p178) target = $region32
      $region31: #{tpu_custom_call.1} parent=5 // pred_region
        // Predicated region
        $region33: #{tpu_custom_call.1} parent=31 // pred_check
          %p181 = pneg %p34
        $region34: #{tpu_custom_call.1} parent=31 // pred_check_branch
          %183 = sbr.rel (%p181) target = $region36
        $region35: #{tpu_custom_call.1} parent=31 // pred_region
          %p184 = scmp.lt.s32.totalorder %s14, 1
          %s185 = scalar_select %p184, %s14, 1
          %s186 = smul.addr %s185, 4
          %s187 = smul.addr %s186, 8
          %s188 = scalar_lea.vmem %s0, %s187
        $region36: #{tpu_custom_call.1} parent=31 // pred_fallthru
          _
      $region32: #{tpu_custom_call.1} parent=5 // pred_fallthru
        _
      %p189 = scmp.le.s32.totalorder 1, %s14
      %p190 = scmp.lt.s32.totalorder %s14, 3
      %p191 = pnand %p189, %p190
      %p192 = pneg %p191
      // Predicated region
      $region37: #{tpu_custom_call.1} parent=5 // pred_check
        _
      $region38: #{tpu_custom_call.1} parent=5 // pred_check_branch
        %194 = sbr.rel (%p191) target = $region40
      $region39: #{tpu_custom_call.1} parent=5 // pred_region
        %s195 = ssub.s32 %s14, 1
        %p196 = scmp.lt.s32.totalorder %s19, 1
        %s197 = scalar_select %p196, %s19, 1
        %s198 = smul.addr %s197, 4
        %s199 = smul.addr %s198, 8
        %s200 = scalar_lea.vmem %s0, %s199
        %p201 = pneg %p40
        %p202 = pneg %p37
        %p203 = pneg %p61
        %p204 = pneg %p58
        %p205 = pneg %p82
        %p206 = pneg %p79
        %p207 = pneg %p103
        %p208 = pneg %p100
        %p209 = pneg %p124
        %p210 = pneg %p121
        %p211 = pneg %p150
        %p212 = pneg %p147
        %s213 = sand.u32 %s137, 1
        %s214 = scalar_lea.sflag [#allocation3], %s213
        %s215 = sand.u32 %s137, 1
        %s216 = smul.addr %s215, 32
        %s217 = scalar_lea.vmem [#allocation2], %s216
        %p218 = scmp.lt.s32.totalorder %s19, 1
        %s219 = scalar_select %p218, %s19, 1
        %s220 = smul.addr %s219, 4
        %s221 = smul.addr %s220, 8
        %s222 = scalar_lea.vmem %s0, %s221
        %v223 = vld [vmem:[%s222] sm:$0xff]
        %v224 = vld [vmem:[%s222 + $0x8] sm:$0xff]
        %v225 = vld [vmem:[%s222 + $0x10] sm:$0xff]
        %v226 = vld [vmem:[%s222 + $0x18] sm:$0xff]
        %v227 = vld [vmem:[%s1] sm:$0xff]
        %v228 = vld [vmem:[%s1 + $0x8] sm:$0xff]
        %v229 = vld [vmem:[%s1 + $0x10] sm:$0xff]
        %v230 = vld [vmem:[%s1 + $0x18] sm:$0xff]
        %v231 = vld [vmem:[%s1 + $0x20] sm:$0xff]
        %v232 = vld [vmem:[%s1 + $0x28] sm:$0xff]
        %v233 = vld [vmem:[%s1 + $0x30] sm:$0xff]
        %v234 = vld [vmem:[%s1 + $0x38] sm:$0xff]
        %v235 = vld [vmem:[%s1 + $0x40] sm:$0xff]
        %v236 = vld [vmem:[%s1 + $0x48] sm:$0xff]
        %v237 = vld [vmem:[%s1 + $0x50] sm:$0xff]
        %v238 = vld [vmem:[%s1 + $0x58] sm:$0xff]
        %vm239 = vcmask 261120
        %v241 = vsel %vm239, %v227, 0
        %v244 = vsel %vm239, %v228, 0
        %v247 = vsel %vm239, %v229, 0
        %v250 = vsel %vm239, %v230, 0
        %v253 = vsel %vm239, %v231, 0
        %v256 = vsel %vm239, %v232, 0
        %v259 = vsel %vm239, %v233, 0
        %v262 = vsel %vm239, %v234, 0
        %v265 = vsel %vm239, %v235, 0
        %v268 = vsel %vm239, %v236, 0
        %v271 = vsel %vm239, %v237, 0
        %v274 = vsel %vm239, %v238, 0
        %276 = vmatprep.subr.mxu0 0.0
        %277 = vmatpush1.msra.mxu0 %v223
        %278 = vmatprep.subr.mxu0 0.0
        %279 = vmatpush1.msra.mxu0 %v224
        %280 = vmatprep.subr.mxu0 0.0
        %281 = vmatpush1.msra.mxu0 %v225
        %282 = vmatprep.subr.mxu0 0.0
        %283 = vmatpush1.msra.mxu0 %v226
        %284 = vmatprep.subr.mxu0 0.0
        %285 = vmatpush1.msra.mxu0 0.0
        %286 = vmatprep.subr.mxu0 0.0
        %287 = vmatpush1.msra.mxu0 0.0
        %288 = vmatprep.subr.mxu0 0.0
        %289 = vmatpush1.msra.mxu0 0.0
        %290 = vmatprep.subr.mxu0 0.0
        %291 = vmatpush1.msra.mxu0 0.0
        %292 = vmatprep.subr.mxu0 0.0
        %293 = vmatpush1.msra.mxu0 0.0
        %294 = vmatprep.subr.mxu0 0.0
        %295 = vmatpush1.msra.mxu0 0.0
        %296 = vmatprep.subr.mxu0 0.0
        %297 = vmatpush1.msra.mxu0 0.0
        %298 = vmatprep.subr.mxu0 0.0
        %299 = vmatpush1.msra.mxu0 0.0
        %300 = vmatprep.subr.mxu0 0.0
        %301 = vmatpush1.msra.mxu0 0.0
        %302 = vmatprep.subr.mxu0 0.0
        %303 = vmatpush1.msra.mxu0 0.0
        %304 = vmatprep.subr.mxu0 0.0
        %305 = vmatpush1.msra.mxu0 0.0
        %306 = vmatprep.subr.mxu0 0.0
        %307 = vmatpush1.msra.mxu0 0.0
        %308 = vmatprep.subr.mxu0 0.0
        %309 = vmatpush1.msra.mxu0 0.0
        %310 = vmatprep.subr.mxu0 0.0
        %311 = vmatpush1.msra.mxu0 0.0
        %312 = vmatprep.subr.mxu0 0.0
        %313 = vmatpush1.msra.mxu0 0.0
        %314 = vmatprep.subr.mxu0 0.0
        %315 = vmatpush1.msra.mxu0 0.0
        %316 = vmatprep.subr.mxu0 0.0
        %317 = vmatpush1.msra.mxu0 0.0
        %318 = vmatprep.subr.mxu0 0.0
        %319 = vmatpush1.msra.mxu0 0.0
        %320 = vmatprep.subr.mxu0 0.0
        %321 = vmatpush1.msra.mxu0 0.0
        %322 = vmatprep.subr.mxu0 0.0
        %323 = vmatpush1.msra.mxu0 0.0
        %324 = vmatprep.subr.mxu0 0.0
        %325 = vmatpush1.msra.mxu0 0.0
        %326 = vmatprep.subr.mxu0 0.0
        %327 = vmatpush1.msra.mxu0 0.0
        %328 = vmatprep.subr.mxu0 0.0
        %329 = vmatpush1.msra.mxu0 0.0
        %330 = vmatprep.subr.mxu0 0.0
        %331 = vmatpush1.msra.mxu0 0.0
        %332 = vmatprep.subr.mxu0 0.0
        %333 = vmatpush1.msra.mxu0 0.0
        %334 = vmatprep.subr.mxu0 0.0
        %335 = vmatpush1.msra.mxu0 0.0
        %336 = vmatprep.subr.mxu0 0.0
        %337 = vmatpush1.msra.mxu0 0.0
        %338 = vmatprep.subr.mxu0 0.0
        %339 = vmatpush1.msra.mxu0 0.0
        %340 = vmatprep.mubr.f32.mxu0 0.0
        %341 = vmatmul.mubr.f32.gmra.mrb[0].mxu0 %v241
        %v342 = vpop.f32.mrb[0].mxu0
        %v343 = vadd.f32 0.0, %v342
        %v344 = vpop.f32.mrb[0].mxu0
        %345 = vmatprep.mubr.f32.mxu0 0.0
        %346 = vmatmul.mubr.f32.gmra.mrb[0].mxu0 %v244
        %v347 = vpop.f32.mrb[0].mxu0
        %v348 = vadd.f32 0.0, %v347
        %v349 = vpop.f32.mrb[0].mxu0
        %350 = vmatprep.mubr.f32.mxu0 0.0
        %351 = vmatmul.mubr.f32.gmra.mrb[0].mxu0 %v247
        %v352 = vpop.f32.mrb[0].mxu0
        %v353 = vadd.f32 0.0, %v352
        %v354 = vpop.f32.mrb[0].mxu0
        %355 = vmatprep.mubr.f32.mxu0 0.0
        %356 = vmatmul.mubr.f32.gmra.mrb[0].mxu0 %v250
        %v357 = vpop.f32.mrb[0].mxu0
        %v358 = vadd.f32 0.0, %v357
        %v359 = vpop.f32.mrb[0].mxu0
        %360 = vmatprep.mubr.f32.mxu0 0.0
        %361 = vmatmul.mubr.f32.gmra.mrb[0].mxu0 %v253
        %v362 = vpop.f32.mrb[0].mxu0
        %v363 = vadd.f32 0.0, %v362
        %v364 = vpop.f32.mrb[0].mxu0
        %365 = vmatprep.mubr.f32.mxu0 0.0
        %366 = vmatmul.mubr.f32.gmra.mrb[0].mxu0 %v256
        %v367 = vpop.f32.mrb[0].mxu0
        %v368 = vadd.f32 0.0, %v367
        %v369 = vpop.f32.mrb[0].mxu0
        %370 = vmatprep.mubr.f32.mxu0 0.0
        %371 = vmatmul.mubr.f32.gmra.mrb[0].mxu0 %v259
        %v372 = vpop.f32.mrb[0].mxu0
        %v373 = vadd.f32 0.0, %v372
        %v374 = vpop.f32.mrb[0].mxu0
        %375 = vmatprep.mubr.f32.mxu0 0.0
        %376 = vmatmul.mubr.f32.gmra.mrb[0].mxu0 %v262
        %v377 = vpop.f32.mrb[0].mxu0
        %v378 = vadd.f32 0.0, %v377
        %v379 = vpop.f32.mrb[0].mxu0
        %380 = vmatprep.mubr.f32.mxu0 0.0
        %381 = vmatmul.mubr.f32.gmra.mrb[0].mxu0 %v265
        %v382 = vpop.f32.mrb[0].mxu0
        %v383 = vadd.f32 0.0, %v382
        %v384 = vpop.f32.mrb[0].mxu0
        %385 = vmatprep.mubr.f32.mxu0 0.0
        %386 = vmatmul.mubr.f32.gmra.mrb[0].mxu0 %v268
        %v387 = vpop.f32.mrb[0].mxu0
        %v388 = vadd.f32 0.0, %v387
        %v389 = vpop.f32.mrb[0].mxu0
        %390 = vmatprep.mubr.f32.mxu0 0.0
        %391 = vmatmul.mubr.f32.gmra.mrb[0].mxu0 %v271
        %v392 = vpop.f32.mrb[0].mxu0
        %v393 = vadd.f32 0.0, %v392
        %v394 = vpop.f32.mrb[0].mxu0
        %395 = vmatprep.mubr.f32.mxu0 0.0
        %396 = vmatmul.mubr.f32.gmra.mrb[0].mxu0 %v274
        %v397 = vpop.f32.mrb[0].mxu0
        %v398 = vadd.f32 0.0, %v397
        %v399 = vpop.f32.mrb[0].mxu0
        %400 = vdwg.mxu0
        %401 = vmatprep.subr.mxu0 0.0
        %402 = vmatpush1.xpose.msra.mxu0 %v363
        %403 = vmatprep.subr.mxu0 0.0
        %404 = vmatpush1.xpose.msra.mxu0 %v368
        %405 = vmatprep.subr.mxu0 0.0
        %406 = vmatpush1.xpose.msra.mxu0 %v373
        %407 = vmatprep.subr.mxu0 0.0
        %408 = vmatpush1.xpose.msra.mxu0 %v378
        %409 = vmatprep.subr.mxu0 0.0
        %410 = vmatpush1.xpose.msra.mxu0 0.0
        %411 = vmatprep.subr.mxu0 0.0
        %412 = vmatpush1.xpose.msra.mxu0 0.0
        %413 = vmatprep.subr.mxu0 0.0
        %414 = vmatpush1.xpose.msra.mxu0 0.0
        %415 = vmatprep.subr.mxu0 0.0
        %416 = vmatpush1.xpose.msra.mxu0 0.0
        %417 = vmatprep.subr.mxu0 0.0
        %418 = vmatpush1.xpose.msra.mxu0 0.0
        %419 = vmatprep.subr.mxu0 0.0
        %420 = vmatpush1.xpose.msra.mxu0 0.0
        %421 = vmatprep.subr.mxu0 0.0
        %422 = vmatpush1.xpose.msra.mxu0 0.0
        %423 = vmatprep.subr.mxu0 0.0
        %424 = vmatpush1.xpose.msra.mxu0 0.0
        %425 = vmatprep.subr.mxu0 0.0
        %426 = vmatpush1.xpose.msra.mxu0 0.0
        %427 = vmatprep.subr.mxu0 0.0
        %428 = vmatpush1.xpose.msra.mxu0 0.0
        %429 = vmatprep.subr.mxu0 0.0
        %430 = vmatpush1.xpose.msra.mxu0 0.0
        %431 = vmatprep.subr.mxu0 0.0
        %432 = vmatpush1.xpose.msra.mxu0 0.0
        %433 = vmatprep.subr.mxu0 0.0
        %434 = vmatpush1.xpose.msra.mxu0 0.0
        %435 = vmatprep.subr.mxu0 0.0
        %436 = vmatpush1.xpose.msra.mxu0 0.0
        %437 = vmatprep.subr.mxu0 0.0
        %438 = vmatpush1.xpose.msra.mxu0 0.0
        %439 = vmatprep.subr.mxu0 0.0
        %440 = vmatpush1.xpose.msra.mxu0 0.0
        %441 = vmatprep.subr.mxu0 0.0
        %442 = vmatpush1.xpose.msra.mxu0 0.0
        %443 = vmatprep.subr.mxu0 0.0
        %444 = vmatpush1.xpose.msra.mxu0 0.0
        %445 = vmatprep.subr.mxu0 0.0
        %446 = vmatpush1.xpose.msra.mxu0 0.0
        %447 = vmatprep.subr.mxu0 0.0
        %448 = vmatpush1.xpose.msra.mxu0 0.0
        %449 = vmatprep.subr.mxu0 0.0
        %450 = vmatpush1.xpose.msra.mxu0 0.0
        %451 = vmatprep.subr.mxu0 0.0
        %452 = vmatpush1.xpose.msra.mxu0 0.0
        %453 = vmatprep.subr.mxu0 0.0
        %454 = vmatpush1.xpose.msra.mxu0 0.0
        %455 = vmatprep.subr.mxu0 0.0
        %456 = vmatpush1.xpose.msra.mxu0 0.0
        %457 = vmatprep.subr.mxu0 0.0
        %458 = vmatpush1.xpose.msra.mxu0 0.0
        %459 = vmatprep.subr.mxu0 0.0
        %460 = vmatpush1.xpose.msra.mxu0 0.0
        %461 = vmatprep.subr.mxu0 0.0
        %462 = vmatpush1.xpose.msra.mxu0 0.0
        %463 = vmatprep.subr.mxu0 0.0
        %464 = vmatpush1.xpose.msra.mxu0 0.0
        %465 = vmatprep.mubr.f32.mxu0 0.0
        %466 = vmatmul.mubr.f32.gmra.mrb[0].mxu0 %v343
        %v467 = vpop.f32.mrb[0].mxu0
        %v468 = vadd.f32 0.0, %v467
        %v469 = vpop.f32.mrb[0].mxu0
        %470 = vmatprep.mubr.f32.mxu0 0.0
        %471 = vmatmul.mubr.f32.gmra.mrb[0].mxu0 %v348
        %v472 = vpop.f32.mrb[0].mxu0
        %v473 = vadd.f32 0.0, %v472
        %v474 = vpop.f32.mrb[0].mxu0
        %475 = vmatprep.mubr.f32.mxu0 0.0
        %476 = vmatmul.mubr.f32.gmra.mrb[0].mxu0 %v353
        %v477 = vpop.f32.mrb[0].mxu0
        %v478 = vadd.f32 0.0, %v477
        %v479 = vpop.f32.mrb[0].mxu0
        %480 = vmatprep.mubr.f32.mxu0 0.0
        %481 = vmatmul.mubr.f32.gmra.mrb[0].mxu0 %v358
        %v482 = vpop.f32.mrb[0].mxu0
        %v483 = vadd.f32 0.0, %v482
        %v484 = vpop.f32.mrb[0].mxu0
        %485 = vdwg.mxu0
        %v486 = vmul.f32 %v468, 0.125
        %v487 = vmul.f32 %v473, 0.125
        %v488 = vmul.f32 %v478, 0.125
        %v489 = vmul.f32 %v483, 0.125
        %v490 = vld [vmem:[%s4] sm:$0xff]
        %v491 = vld [vmem:[%s4 + $0x8] sm:$0xff]
        %v492 = vld [vmem:[%s4 + $0x10] sm:$0xff]
        %v493 = vld [vmem:[%s4 + $0x18] sm:$0xff]
        %v494 = vadd.f32 %v486, %v490
        %v495 = vadd.f32 %v487, %v491
        %v496 = vadd.f32 %v488, %v492
        %v497 = vadd.f32 %v489, %v493
        %v498 = vsel %vm239, %v494, -inf
        %499 = vmax.xlane.f32.xlu0 %v498
        %v500 = vpop.xlane.xlu0 %499
        %v501 = vsel %vm239, %v495, -inf
        %502 = vmax.xlane.f32.xlu0 %v501
        %v503 = vpop.xlane.xlu0 %502
        %v504 = vsel %vm239, %v496, -inf
        %505 = vmax.xlane.f32.xlu0 %v504
        %v506 = vpop.xlane.xlu0 %505
        %v507 = vsel %vm239, %v497, -inf
        %508 = vmax.xlane.f32.xlu0 %v507
        %v509 = vpop.xlane.xlu0 %508
        %v510 = vsub.f32 %v494, %v500
        %v511 = vsub.f32 %v495, %v503
        %v512 = vsub.f32 %v496, %v506
        %v513 = vsub.f32 %v497, %v509
        %v514 = vmul.f32 %v510, 1.442695
        %v515 = vpow.pop %v514
        %v516 = vmul.f32 %v511, 1.442695
        %v517 = vpow.pop %v516
        %v518 = vmul.f32 %v512, 1.442695
        %v519 = vpow.pop %v518
        %v520 = vmul.f32 %v513, 1.442695
        %v521 = vpow.pop %v520
        %v522 = vsel %vm239, %v515, 0.0
        %523 = vadd.xlane.f32.xlu0 %v522
        %v524 = vpop.xlane.xlu0 %523
        %v525 = vsel %vm239, %v517, 0.0
        %526 = vadd.xlane.f32.xlu0 %v525
        %v527 = vpop.xlane.xlu0 %526
        %v528 = vsel %vm239, %v519, 0.0
        %529 = vadd.xlane.f32.xlu0 %v528
        %v530 = vpop.xlane.xlu0 %529
        %v531 = vsel %vm239, %v521, 0.0
        %532 = vadd.xlane.f32.xlu0 %v531
        %v533 = vpop.xlane.xlu0 %532
        %v534 = vrcp.pop %v524
        %v535 = vmul.f32 %v515, %v534
        %v536 = vrcp.pop %v527
        %v537 = vmul.f32 %v517, %v536
        %v538 = vrcp.pop %v530
        %v539 = vmul.f32 %v519, %v538
        %v540 = vrcp.pop %v533
        %v541 = vmul.f32 %v521, %v540
        %v543 = vsel %vm239, %v535, 0
        %v546 = vsel %vm239, %v537, 0
        %v549 = vsel %vm239, %v539, 0
        %v552 = vsel %vm239, %v541, 0
        %554 = vmatprep.subr.mxu0 0.0
        %555 = vmatpush1.msra.mxu0 %v383
        %556 = vmatprep.subr.mxu0 0.0
        %557 = vmatpush1.msra.mxu0 %v388
        %558 = vmatprep.subr.mxu0 0.0
        %559 = vmatpush1.msra.mxu0 %v393
        %560 = vmatprep.subr.mxu0 0.0
        %561 = vmatpush1.msra.mxu0 %v398
        %562 = vmatprep.subr.mxu0 0.0
        %563 = vmatpush1.msra.mxu0 0.0
        %564 = vmatprep.subr.mxu0 0.0
        %565 = vmatpush1.msra.mxu0 0.0
        %566 = vmatprep.subr.mxu0 0.0
        %567 = vmatpush1.msra.mxu0 0.0
        %568 = vmatprep.subr.mxu0 0.0
        %569 = vmatpush1.msra.mxu0 0.0
        %570 = vmatprep.subr.mxu0 0.0
        %571 = vmatpush1.msra.mxu0 0.0
        %572 = vmatprep.subr.mxu0 0.0
        %573 = vmatpush1.msra.mxu0 0.0
        %574 = vmatprep.subr.mxu0 0.0
        %575 = vmatpush1.msra.mxu0 0.0
        %576 = vmatprep.subr.mxu0 0.0
        %577 = vmatpush1.msra.mxu0 0.0
        %578 = vmatprep.subr.mxu0 0.0
        %579 = vmatpush1.msra.mxu0 0.0
        %580 = vmatprep.subr.mxu0 0.0
        %581 = vmatpush1.msra.mxu0 0.0
        %582 = vmatprep.subr.mxu0 0.0
        %583 = vmatpush1.msra.mxu0 0.0
        %584 = vmatprep.subr.mxu0 0.0
        %585 = vmatpush1.msra.mxu0 0.0
        %586 = vmatprep.subr.mxu0 0.0
        %587 = vmatpush1.msra.mxu0 0.0
        %588 = vmatprep.subr.mxu0 0.0
        %589 = vmatpush1.msra.mxu0 0.0
        %590 = vmatprep.subr.mxu0 0.0
        %591 = vmatpush1.msra.mxu0 0.0
        %592 = vmatprep.subr.mxu0 0.0
        %593 = vmatpush1.msra.mxu0 0.0
        %594 = vmatprep.subr.mxu0 0.0
        %595 = vmatpush1.msra.mxu0 0.0
        %596 = vmatprep.subr.mxu0 0.0
        %597 = vmatpush1.msra.mxu0 0.0
        %598 = vmatprep.subr.mxu0 0.0
        %599 = vmatpush1.msra.mxu0 0.0
        %600 = vmatprep.subr.mxu0 0.0
        %601 = vmatpush1.msra.mxu0 0.0
        %602 = vmatprep.subr.mxu0 0.0
        %603 = vmatpush1.msra.mxu0 0.0
        %604 = vmatprep.subr.mxu0 0.0
        %605 = vmatpush1.msra.mxu0 0.0
        %606 = vmatprep.subr.mxu0 0.0
        %607 = vmatpush1.msra.mxu0 0.0
        %608 = vmatprep.subr.mxu0 0.0
        %609 = vmatpush1.msra.mxu0 0.0
        %610 = vmatprep.subr.mxu0 0.0
        %611 = vmatpush1.msra.mxu0 0.0
        %612 = vmatprep.subr.mxu0 0.0
        %613 = vmatpush1.msra.mxu0 0.0
        %614 = vmatprep.subr.mxu0 0.0
        %615 = vmatpush1.msra.mxu0 0.0
        %616 = vmatprep.subr.mxu0 0.0
        %617 = vmatpush1.msra.mxu0 0.0
        %618 = vmatprep.mubr.f32.mxu0 0.0
        %619 = vmatmul.mubr.f32.gmra.mrb[0].mxu0 %v543
        %v620 = vpop.f32.mrb[0].mxu0
        %v621 = vadd.f32 0.0, %v620
        %v622 = vpop.f32.mrb[0].mxu0
        %623 = vmatprep.mubr.f32.mxu0 0.0
        %624 = vmatmul.mubr.f32.gmra.mrb[0].mxu0 %v546
        %v625 = vpop.f32.mrb[0].mxu0
        %v626 = vadd.f32 0.0, %v625
        %v627 = vpop.f32.mrb[0].mxu0
        %628 = vmatprep.mubr.f32.mxu0 0.0
        %629 = vmatmul.mubr.f32.gmra.mrb[0].mxu0 %v549
        %v630 = vpop.f32.mrb[0].mxu0
        %v631 = vadd.f32 0.0, %v630
        %v632 = vpop.f32.mrb[0].mxu0
        %633 = vmatprep.mubr.f32.mxu0 0.0
        %634 = vmatmul.mubr.f32.gmra.mrb[0].mxu0 %v552
        %v635 = vpop.f32.mrb[0].mxu0
        %v636 = vadd.f32 0.0, %v635
        %v637 = vpop.f32.mrb[0].mxu0
        %638 = vdwg.mxu0
        %v639 = vld [vmem:[%s2] sm:$0xff]
        %v640 = vld [vmem:[%s2 + $0x8] sm:$0xff]
        %v641 = vld [vmem:[%s2 + $0x10] sm:$0xff]
        %v642 = vld [vmem:[%s2 + $0x18] sm:$0xff]
        %v643 = vld [vmem:[%s3] sm:$0xff]
        %v644 = vld [vmem:[%s3 + $0x8] sm:$0xff]
        %v645 = vld [vmem:[%s3 + $0x10] sm:$0xff]
        %v646 = vld [vmem:[%s3 + $0x18] sm:$0xff]
        %648 = vset.pattern.permute.xlu0 0
        %649 = vperm.xlu0 %648, %v643
        %v650 = vpop.permute.xlu0 %649
        %653 = vset.pattern.permute.xlu0 0
        %654 = vperm.xlu0 %653, %v644
        %v655 = vpop.permute.xlu0 %654
        %658 = vset.pattern.permute.xlu0 0
        %659 = vperm.xlu0 %658, %v645
        %v660 = vpop.permute.xlu0 %659
        %663 = vset.pattern.permute.xlu0 0
        %664 = vperm.xlu0 %663, %v646
        %v665 = vpop.permute.xlu0 %664
        %v668 = vsel %vm239, %v639, 0
        %v671 = vsel %vm239, %v640, 0
        %v674 = vsel %vm239, %v641, 0
        %v677 = vsel %vm239, %v642, 0
        %679 = vmatprep.subr.mxu0 0.0
        %680 = vmatpush1.msra.mxu0 %v621
        %681 = vmatprep.subr.mxu0 0.0
        %682 = vmatpush1.msra.mxu0 %v626
        %683 = vmatprep.subr.mxu0 0.0
        %684 = vmatpush1.msra.mxu0 %v631
        %685 = vmatprep.subr.mxu0 0.0
        %686 = vmatpush1.msra.mxu0 %v636
        %687 = vmatprep.subr.mxu0 0.0
        %688 = vmatpush1.msra.mxu0 0.0
        %689 = vmatprep.subr.mxu0 0.0
        %690 = vmatpush1.msra.mxu0 0.0
        %691 = vmatprep.subr.mxu0 0.0
        %692 = vmatpush1.msra.mxu0 0.0
        %693 = vmatprep.subr.mxu0 0.0
        %694 = vmatpush1.msra.mxu0 0.0
        %695 = vmatprep.subr.mxu0 0.0
        %696 = vmatpush1.msra.mxu0 0.0
        %697 = vmatprep.subr.mxu0 0.0
        %698 = vmatpush1.msra.mxu0 0.0
        %699 = vmatprep.subr.mxu0 0.0
        %700 = vmatpush1.msra.mxu0 0.0
        %701 = vmatprep.subr.mxu0 0.0
        %702 = vmatpush1.msra.mxu0 0.0
        %703 = vmatprep.subr.mxu0 0.0
        %704 = vmatpush1.msra.mxu0 0.0
        %705 = vmatprep.subr.mxu0 0.0
        %706 = vmatpush1.msra.mxu0 0.0
        %707 = vmatprep.subr.mxu0 0.0
        %708 = vmatpush1.msra.mxu0 0.0
        %709 = vmatprep.subr.mxu0 0.0
        %710 = vmatpush1.msra.mxu0 0.0
        %711 = vmatprep.subr.mxu0 0.0
        %712 = vmatpush1.msra.mxu0 0.0
        %713 = vmatprep.subr.mxu0 0.0
        %714 = vmatpush1.msra.mxu0 0.0
        %715 = vmatprep.subr.mxu0 0.0
        %716 = vmatpush1.msra.mxu0 0.0
        %717 = vmatprep.subr.mxu0 0.0
        %718 = vmatpush1.msra.mxu0 0.0
        %719 = vmatprep.subr.mxu0 0.0
        %720 = vmatpush1.msra.mxu0 0.0
        %721 = vmatprep.subr.mxu0 0.0
        %722 = vmatpush1.msra.mxu0 0.0
        %723 = vmatprep.subr.mxu0 0.0
        %724 = vmatpush1.msra.mxu0 0.0
        %725 = vmatprep.subr.mxu0 0.0
        %726 = vmatpush1.msra.mxu0 0.0
        %727 = vmatprep.subr.mxu0 0.0
        %728 = vmatpush1.msra.mxu0 0.0
        %729 = vmatprep.subr.mxu0 0.0
        %730 = vmatpush1.msra.mxu0 0.0
        %731 = vmatprep.subr.mxu0 0.0
        %732 = vmatpush1.msra.mxu0 0.0
        %733 = vmatprep.subr.mxu0 0.0
        %734 = vmatpush1.msra.mxu0 0.0
        %735 = vmatprep.subr.mxu0 0.0
        %736 = vmatpush1.msra.mxu0 0.0
        %737 = vmatprep.subr.mxu0 0.0
        %738 = vmatpush1.msra.mxu0 0.0
        %739 = vmatprep.subr.mxu0 0.0
        %740 = vmatpush1.msra.mxu0 0.0
        %741 = vmatprep.subr.mxu0 0.0
        %742 = vmatpush1.msra.mxu0 0.0
        %743 = vmatprep.mubr.f32.mxu0 0.0
        %744 = vmatmul.mubr.f32.gmra.mrb[0].mxu0 %v668
        %v745 = vpop.f32.mrb[0].mxu0
        %v746 = vadd.f32 %v650, %v745
        %v747 = vpop.f32.mrb[0].mxu0
        %748 = vmatprep.mubr.f32.mxu0 0.0
        %749 = vmatmul.mubr.f32.gmra.mrb[0].mxu0 %v671
        %v750 = vpop.f32.mrb[0].mxu0
        %v751 = vadd.f32 %v655, %v750
        %v752 = vpop.f32.mrb[0].mxu0
        %753 = vmatprep.mubr.f32.mxu0 0.0
        %754 = vmatmul.mubr.f32.gmra.mrb[0].mxu0 %v674
        %v755 = vpop.f32.mrb[0].mxu0
        %v756 = vadd.f32 %v660, %v755
        %v757 = vpop.f32.mrb[0].mxu0
        %758 = vmatprep.mubr.f32.mxu0 0.0
        %759 = vmatmul.mubr.f32.gmra.mrb[0].mxu0 %v677
        %v760 = vpop.f32.mrb[0].mxu0
        %v761 = vadd.f32 %v665, %v760
        %v762 = vpop.f32.mrb[0].mxu0
        %763 = vdwg.mxu0
        %764 = vst [vmem:[%s217] sm:$0xff] %v746
        %765 = vst [vmem:[%s217 + $0x8] sm:$0xff] %v751
        %766 = vst [vmem:[%s217 + $0x10] sm:$0xff] %v756
        %767 = vst [vmem:[%s217 + $0x18] sm:$0xff] %v761
        %s768 = sand.u32 %s137, 1
        %s769 = scalar_lea.sflag [#allocation3], %s768
        %s770 = sand.u32 %s137, 1
        %s771 = smul.addr %s770, 32
        %s772 = scalar_lea.vmem [#allocation2], %s771
        // Predicated region
        $region41: #{tpu_custom_call.1} parent=39 // pred_check
          %p773 = pneg %p147
        $region42: #{tpu_custom_call.1} parent=39 // pred_check_branch
          %775 = sbr.rel (%p773) target = $region44
        $region43: #{tpu_custom_call.1} parent=39 // pred_region
          %s777 = ssub.s32 512, 512
          %778 = vsyncadd %s769, %s777
          %s779 = smul.addr %s19, 4
          %s780 = smul.addr %s779, 128
          %s781 = scalar_lea.hbm %s5, %s780
          %s782 = sshll.u32 %s772, 4
          %s783 = int_to_ptr.vmem [resolvable:$true] %s782
          %788 = dma.vmem_to_hbm [thread:$0]  %s783, 512, %s781, %s769, 128, 128, 8
        $region44: #{tpu_custom_call.1} parent=39 // pred_fallthru
          _
      $region40: #{tpu_custom_call.1} parent=5 // pred_fallthru
        _
      %p789 = scmp.le.s32.totalorder 2, %s14
      // Predicated region
      $region45: #{tpu_custom_call.1} parent=5 // pred_check
        %p790 = pneg %p789
      $region46: #{tpu_custom_call.1} parent=5 // pred_check_branch
        %792 = sbr.rel (%p790) target = $region48
      $region47: #{tpu_custom_call.1} parent=5 // pred_region
        %s793 = ssub.s32 %s14, 2
        // Predicated region
        $region49: #{tpu_custom_call.1} parent=47 // pred_check
          %p794 = pneg %p153
        $region50: #{tpu_custom_call.1} parent=47 // pred_check_branch
          %796 = sbr.rel (%p794) target = $region52
        $region51: #{tpu_custom_call.1} parent=47 // pred_region
          %s797 = sand.u32 %s138, 1
          %s798 = scalar_lea.sflag [#allocation3], %s797
          %s799 = sand.u32 %s138, 1
          %s800 = smul.addr %s799, 32
          %s801 = scalar_lea.vmem [#allocation2], %s800
          %802 = dma.done %s798, 512
        $region52: #{tpu_custom_call.1} parent=47 // pred_fallthru
          _
      $region48: #{tpu_custom_call.1} parent=5 // pred_fallthru
        _
    $region6: #{tpu_custom_call.1} parent=1 // loop_footer
      %s18 = sadd.s32 1, %s14
    $region7: #{tpu_custom_call.1} parent=1 // loop_footer_branch
      %13 = sbr.rel target = $region3
    $region8: #{tpu_custom_call.1} parent=1 // loop_exit
      _
    %803 = vsyncpa [#allocation3], 1
    %s804 = scalar_lea.sflag [#allocation3], 1
    %805 = vsyncpa %s804, 1

</llo_original>
